<compile_context>
chip_gen: v5e
topology: v5e:2x2
jax: 0.10.0
libtpu: 0.0.40
codegen_flags: <defaults>
</compile_context>

<pallas_src>
import functools
import math

import jax
import jax.numpy as jnp
from jax.experimental import pallas as pl
from jax.experimental.pallas import tpu as pltpu


def _round_up(x, m):
    return (x + m - 1) // m * m


def _autoencoder_kernel(x_ref,
                        w1_ref, b1_ref, w2_ref, b2_ref,   # encoder (phi)
                        w3_ref, b3_ref, w4_ref, b4_ref,   # decoder (reverse_phi)
                        z_ref, xhat_ref, partial_ref,
                        *, b_orig, mm_dtype):
    x = x_ref[...]                                         # (TB, F_pad) f32

    # Hoisted bias loads (loaded once per grid step, f32).
    b1 = b1_ref[...]
    b2 = b2_ref[...]
    b3 = b3_ref[...]
    b4 = b4_ref[...]

    # ---- encode: Linear(F,H) -> tanh -> Linear(H,L) -> tanh ----
    h1 = jnp.tanh(jnp.dot(x.astype(mm_dtype), w1_ref[...].astype(mm_dtype),
                          preferred_element_type=jnp.float32) + b1)          # (TB, H_pad)
    z = jnp.tanh(jnp.dot(h1.astype(mm_dtype), w2_ref[...].astype(mm_dtype),
                         preferred_element_type=jnp.float32) + b2)           # (TB, L_pad)

    # ---- decode: Linear(L,H) -> tanh -> Linear(H,F) -> tanh ----
    h2 = jnp.tanh(jnp.dot(z.astype(mm_dtype), w3_ref[...].astype(mm_dtype),
                          preferred_element_type=jnp.float32) + b3)          # (TB, H_pad)
    xhat = jnp.tanh(jnp.dot(h2.astype(mm_dtype), w4_ref[...].astype(mm_dtype),
                            preferred_element_type=jnp.float32) + b4)        # (TB, F_pad)

    z_ref[...] = z
    xhat_ref[...] = xhat

    # ---- per-tile sum of squared error (padded rows masked out; padded cols are exactly 0) ----
    if b_orig is None:
        diff = x - xhat
    else:
        rows = (jax.lax.broadcasted_iota(jnp.int32, x.shape, 0)
                + pl.program_id(0) * x.shape[0])
        diff = jnp.where(rows < b_orig, x - xhat, 0.0)
    partial_ref[...] = jnp.sum(diff * diff).reshape(1, 1, 1)


def _pad_params(params, F_pad, H_pad, L_pad):
    """Zero-pad weights/biases to lane-dense shapes. Zero padding keeps the math exact."""
    w1, b1, w2, b2, w3, b3, w4, b4 = params

    def pad2(a, r, c):
        return jnp.pad(a, ((0, r - a.shape[0]), (0, c - a.shape[1])))

    return (pad2(w1, F_pad, H_pad), pad2(b1, 1, H_pad),
            pad2(w2, H_pad, L_pad), pad2(b2, 1, L_pad),
            pad2(w3, L_pad, H_pad), pad2(b3, 1, H_pad),
            pad2(w4, H_pad, F_pad), pad2(b4, 1, F_pad))


def autoencoder_forward(x_nchw, params, *, tile_b=256, matmul_dtype=None):
    """Returns (z, x_hat_nchw, mse_loss).

    x_nchw: (B, C, H, W) float32.  params: (w1,b1,w2,b2,w3,b3,w4,b4), weights as (fan_in, fan_out).
    matmul_dtype: None (exact f32) or e.g. jnp.bfloat16 for v6e/v7x MXU speed (tanh/bias/loss stay f32).
    """
    B = x_nchw.shape[0]
    input_shape = x_nchw.shape[1:]
    F = math.prod(input_shape)

    w1, _, w2, _, _, _, _, _ = params
    H = w1.shape[1]
    L = w2.shape[1]
    assert w1.shape[0] == F, "weight fan_in must match flattened input size"

    # Lane-dense padded dims.
    F_pad = _round_up(F, 128)
    H_pad = _round_up(H, 128)
    L_pad = _round_up(L, 128)

    # Batch tile: target `tile_b` rows (MXU-filling), sublane-aligned, never larger than needed.
    TB = min(_round_up(tile_b, 8), _round_up(B, 8))
    B_pad = _round_up(B, TB)
    n_tiles = B_pad // TB

    x_flat = x_nchw.reshape(B, F).astype(jnp.float32)
    x_p = jnp.pad(x_flat, ((0, B_pad - B), (0, F_pad - F)))

    pw1, pb1, pw2, pb2, pw3, pb3, pw4, pb4 = _pad_params(params, F_pad, H_pad, L_pad)
    mm_dtype = jnp.float32 if matmul_dtype is None else matmul_dtype
    if matmul_dtype is not None:
        # Cast weights on the host side so their DMA bytes are halved too.
        pw1, pw2, pw3, pw4 = [w.astype(mm_dtype) for w in (pw1, pw2, pw3, pw4)]

    kernel = functools.partial(
        _autoencoder_kernel,
        b_orig=None if B == B_pad else B,
        mm_dtype=mm_dtype,
    )

    # Weights/biases: constant block index -> stay resident in VMEM across grid steps.
    resident = lambda shape: pl.BlockSpec(shape, lambda i, _s=len(shape): (0,) * _s)
    # Batch-tiled arrays: block index follows the grid.
    batch = lambda shape: pl.BlockSpec(shape, lambda i, _s=len(shape): (i,) + (0,) * (_s - 1))

    z_p, xhat_p, partial = pl.pallas_call(
        kernel,
        grid=(n_tiles,),
        in_specs=[
            batch((TB, F_pad)),
            resident((F_pad, H_pad)), resident((1, H_pad)),
            resident((H_pad, L_pad)), resident((1, L_pad)),
            resident((L_pad, H_pad)), resident((1, H_pad)),
            resident((H_pad, F_pad)), resident((1, F_pad)),
        ],
        out_specs=(
            batch((TB, L_pad)),
            batch((TB, F_pad)),
            pl.BlockSpec((1, 1, 1), lambda i: (i, 0, 0)),
        ),
        out_shape=(
            jax.ShapeDtypeStruct((B_pad, L_pad), jnp.float32),
            jax.ShapeDtypeStruct((B_pad, F_pad), jnp.float32),
            jax.ShapeDtypeStruct((n_tiles, 1, 1), jnp.float32),
        ),
        compiler_params=pltpu.CompilerParams(
            dimension_semantics=("parallel",),        # shards batch tiles across v7x's 2 TCs
            vmem_limit_bytes=48 * 1024 * 1024,        # fits v7x's 64 MiB physical VMEM
        ),
    )(x_p, pw1, pb1, pw2, pb2, pw3, pb3, pw4, pb4)

    z = z_p[:B, :L]
    x_hat = xhat_p[:B, :F].reshape(B, *input_shape)
    loss = jnp.sum(partial) / jnp.float32(B * F)      # exact mean over original elements
    return z, x_hat, loss


def autoencoder_reference(x_nchw, params):
    """Pure-JAX reference (same math as the PyTorch module)."""
    B = x_nchw.shape[0]
    input_shape = x_nchw.shape[1:]
    F = math.prod(input_shape)
    w1, b1, w2, b2, w3, b3, w4, b4 = params
    x = x_nchw.reshape(B, F).astype(jnp.float32)
    h1 = jnp.tanh(x @ w1 + b1)
    z = jnp.tanh(h1 @ w2 + b2)
    h2 = jnp.tanh(z @ w3 + b3)
    xhat = jnp.tanh(h2 @ w4 + b4)
    loss = jnp.mean((x - xhat) ** 2)
    return z, xhat.reshape(B, *input_shape), loss


def init_params(key, F, H, L):
    """Deterministic init matching torch.nn.Linear default: U(-1/sqrt(fan_in), 1/sqrt(fan_in))."""
    def linear(k, fan_in, fan_out):
        kw, kb = jax.random.split(k)
        bound = 1.0 / jnp.sqrt(jnp.float32(fan_in))
        w = jax.random.uniform(kw, (fan_in, fan_out), jnp.float32, -bound, bound)
        b = jax.random.uniform(kb, (1, fan_out), jnp.float32, -bound, bound)
        return w, b

    k1, k2, k3, k4 = jax.random.split(key, 4)
    w1, b1 = linear(k1, F, H)   # phi: Linear(F, H)
    w2, b2 = linear(k2, H, L)   # phi: Linear(H, L)
    w3, b3 = linear(k3, L, H)   # reverse_phi: Linear(L, H)
    w4, b4 = linear(k4, H, F)   # reverse_phi: Linear(H, F)
    return (w1, b1, w2, b2, w3, b3, w4, b4)


# TODO(synk): train_batch / Adam optimizer step (backward pass) is not part of the forward kernel.

if __name__ == "__main__":
    # args.latent_dims=8, args.n_units_per_layer=32, args.n_hidden_layers=1,
    # input_shape=(4, 16, 16), batch=2
    B, C, Hs, Ws = 2, 4, 16, 16
    F = C * Hs * Ws
    HID, LAT = 32, 8

    key = jax.random.PRNGKey(0)
    kx, kp = jax.random.split(key)
    x0 = jax.random.normal(kx, (B, C, Hs, Ws), jnp.float32)
    params = init_params(kp, F, HID, LAT)

    z, x_hat, loss = autoencoder_forward(x0, params)
    jax.block_until_ready((z, x_hat, loss))

    assert z.shape == (B, LAT)
    assert x_hat.shape == (B, C, Hs, Ws)
    assert loss.shape == ()

    # Correctness check against the pure-JAX reference (loose tol: MXU vs XLA matmul rounding).
    z_ref, xhat_ref, loss_ref = autoencoder_reference(x0, params)
    assert jnp.allclose(z, z_ref, atol=1e-2, rtol=1e-2)
    assert jnp.allclose(x_hat, xhat_ref, atol=1e-2, rtol=1e-2)
    assert jnp.allclose(loss, loss_ref, atol=1e-2, rtol=1e-2)

    print("KERNEL_OK")
</pallas_src>

<mosaic_0001>
module attributes {stable_mosaic.version = 11 : i64} {
  func.func @_autoencoder_kernel(%arg0: i32, %arg1: memref<8x1024xf32, #tpu.memory_space<vmem>>, %arg2: memref<1024x128xf32, #tpu.memory_space<vmem>>, %arg3: memref<1x128xf32, #tpu.memory_space<vmem>>, %arg4: memref<128x128xf32, #tpu.memory_space<vmem>>, %arg5: memref<1x128xf32, #tpu.memory_space<vmem>>, %arg6: memref<128x128xf32, #tpu.memory_space<vmem>>, %arg7: memref<1x128xf32, #tpu.memory_space<vmem>>, %arg8: memref<128x1024xf32, #tpu.memory_space<vmem>>, %arg9: memref<1x1024xf32, #tpu.memory_space<vmem>>, %arg10: memref<8x128xf32, #tpu.memory_space<vmem>>, %arg11: memref<8x1024xf32, #tpu.memory_space<vmem>>, %arg12: memref<1x1x1xf32, #tpu.memory_space<vmem>>) attributes {dimension_semantics = [#tpu.dimension_semantics<parallel>], iteration_bounds = array<i64: 1>, scalar_prefetch = 0 : i64, scratch_operands = 0 : i64, tpu.core_type = #tpu.core_type<tc>, window_params = [{transform_indices = @transform_0, window_bounds = array<i64: 8, 1024>}, {pipeline_mode = #tpu.pipeline_mode<synchronous>, transform_indices = @transform_1, window_bounds = array<i64: 1024, 128>}, {pipeline_mode = #tpu.pipeline_mode<synchronous>, transform_indices = @transform_2, window_bounds = array<i64: 1, 128>}, {pipeline_mode = #tpu.pipeline_mode<synchronous>, transform_indices = @transform_3, window_bounds = array<i64: 128, 128>}, {pipeline_mode = #tpu.pipeline_mode<synchronous>, transform_indices = @transform_4, window_bounds = array<i64: 1, 128>}, {pipeline_mode = #tpu.pipeline_mode<synchronous>, transform_indices = @transform_5, window_bounds = array<i64: 128, 128>}, {pipeline_mode = #tpu.pipeline_mode<synchronous>, transform_indices = @transform_6, window_bounds = array<i64: 1, 128>}, {pipeline_mode = #tpu.pipeline_mode<synchronous>, transform_indices = @transform_7, window_bounds = array<i64: 128, 1024>}, {pipeline_mode = #tpu.pipeline_mode<synchronous>, transform_indices = @transform_8, window_bounds = array<i64: 1, 1024>}, {transform_indices = @transform_9, window_bounds = array<i64: 8, 128>}, {transform_indices = @transform_10, window_bounds = array<i64: 8, 1024>}, {transform_indices = @transform_11, window_bounds = array<i64: 1, 1, 1>}]} {
    %c0 = arith.constant 0 : index
    %c0_0 = arith.constant 0 : index
    %0 = vector.load %arg1[%c0, %c0_0] : memref<8x1024xf32, #tpu.memory_space<vmem>>, vector<8x1024xf32>
    %c0_1 = arith.constant 0 : index
    %c0_2 = arith.constant 0 : index
    %1 = vector.load %arg3[%c0_1, %c0_2] : memref<1x128xf32, #tpu.memory_space<vmem>>, vector<1x128xf32>
    %c0_3 = arith.constant 0 : index
    %c0_4 = arith.constant 0 : index
    %2 = vector.load %arg5[%c0_3, %c0_4] : memref<1x128xf32, #tpu.memory_space<vmem>>, vector<1x128xf32>
    %c0_5 = arith.constant 0 : index
    %c0_6 = arith.constant 0 : index
    %3 = vector.load %arg7[%c0_5, %c0_6] : memref<1x128xf32, #tpu.memory_space<vmem>>, vector<1x128xf32>
    %c0_7 = arith.constant 0 : index
    %c0_8 = arith.constant 0 : index
    %4 = vector.load %arg9[%c0_7, %c0_8] : memref<1x1024xf32, #tpu.memory_space<vmem>>, vector<1x1024xf32>
    %c0_9 = arith.constant 0 : index
    %c0_10 = arith.constant 0 : index
    %5 = vector.load %arg2[%c0_9, %c0_10] : memref<1024x128xf32, #tpu.memory_space<vmem>>, vector<1024x128xf32>
    %cst = arith.constant dense<0.000000e+00> : vector<8x128xf32>
    %6 = tpu.matmul %0, %5, %cst {dimension_numbers = #tpu.dot_dimension_numbers<[1], [0], [0], [1], [0, 0, 1, 1], [], []>} : vector<8x1024xf32>, vector<1024x128xf32>, vector<8x128xf32> -> vector<8x128xf32>
    %7 = vector.broadcast %1 : vector<1x128xf32> to vector<8x128xf32>
    %8 = arith.addf %6, %7 : vector<8x128xf32>
    %9 = math.tanh %8 : vector<8x128xf32>
    %c0_11 = arith.constant 0 : index
    %c0_12 = arith.constant 0 : index
    %10 = vector.load %arg4[%c0_11, %c0_12] : memref<128x128xf32, #tpu.memory_space<vmem>>, vector<128x128xf32>
    %cst_13 = arith.constant dense<0.000000e+00> : vector<8x128xf32>
    %11 = tpu.matmul %9, %10, %cst_13 {dimension_numbers = #tpu.dot_dimension_numbers<[1], [0], [0], [1], [0, 0, 1, 1], [], []>} : vector<8x128xf32>, vector<128x128xf32>, vector<8x128xf32> -> vector<8x128xf32>
    %12 = vector.broadcast %2 : vector<1x128xf32> to vector<8x128xf32>
    %13 = arith.addf %11, %12 : vector<8x128xf32>
    %14 = math.tanh %13 : vector<8x128xf32>
    %c0_14 = arith.constant 0 : index
    %c0_15 = arith.constant 0 : index
    %15 = vector.load %arg6[%c0_14, %c0_15] : memref<128x128xf32, #tpu.memory_space<vmem>>, vector<128x128xf32>
    %cst_16 = arith.constant dense<0.000000e+00> : vector<8x128xf32>
    %16 = tpu.matmul %14, %15, %cst_16 {dimension_numbers = #tpu.dot_dimension_numbers<[1], [0], [0], [1], [0, 0, 1, 1], [], []>} : vector<8x128xf32>, vector<128x128xf32>, vector<8x128xf32> -> vector<8x128xf32>
    %17 = vector.broadcast %3 : vector<1x128xf32> to vector<8x128xf32>
    %18 = arith.addf %16, %17 : vector<8x128xf32>
    %19 = math.tanh %18 : vector<8x128xf32>
    %c0_17 = arith.constant 0 : index
    %c0_18 = arith.constant 0 : index
    %20 = vector.load %arg8[%c0_17, %c0_18] : memref<128x1024xf32, #tpu.memory_space<vmem>>, vector<128x1024xf32>
    %cst_19 = arith.constant dense<0.000000e+00> : vector<8x1024xf32>
    %21 = tpu.matmul %19, %20, %cst_19 {dimension_numbers = #tpu.dot_dimension_numbers<[1], [0], [0], [1], [0, 0, 1, 1], [], []>} : vector<8x128xf32>, vector<128x1024xf32>, vector<8x1024xf32> -> vector<8x1024xf32>
    %22 = vector.broadcast %4 : vector<1x1024xf32> to vector<8x1024xf32>
    %23 = arith.addf %21, %22 : vector<8x1024xf32>
    %24 = math.tanh %23 : vector<8x1024xf32>
    %c0_20 = arith.constant 0 : index
    %c0_21 = arith.constant 0 : index
    %25 = vector.load %arg10[%c0_20, %c0_21] : memref<8x128xf32, #tpu.memory_space<vmem>>, vector<8x128xf32>
    tpu.vector_store %arg10[%c0_20, %c0_21], %14 {strides = array<i32>} : memref<8x128xf32, #tpu.memory_space<vmem>>, vector<8x128xf32>,
    %c0_22 = arith.constant 0 : index
    %c0_23 = arith.constant 0 : index
    %26 = vector.load %arg11[%c0_22, %c0_23] : memref<8x1024xf32, #tpu.memory_space<vmem>>, vector<8x1024xf32>
    tpu.vector_store %arg11[%c0_22, %c0_23], %24 {strides = array<i32>} : memref<8x1024xf32, #tpu.memory_space<vmem>>, vector<8x1024xf32>,
    %27 = tpu.iota {dimensions = array<i32: 0>} : vector<8x1024xi32>
    %c8_i32 = arith.constant 8 : i32
    %28 = arith.muli %arg0, %c8_i32 : i32
    %29 = vector.broadcast %28 : i32 to vector<8x1024xi32>
    %30 = arith.addi %27, %29 : vector<8x1024xi32>
    %c2_i32 = arith.constant 2 : i32
    %31 = vector.broadcast %c2_i32 : i32 to vector<8x1024xi32>
    %32 = arith.cmpi slt, %30, %31 : vector<8x1024xi32>
    %33 = arith.subf %0, %24 : vector<8x1024xf32>
    %cst_24 = arith.constant 0.000000e+00 : f32
    %34 = vector.broadcast %cst_24 : f32 to vector<8x1024xf32>
    %35 = arith.select %32, %33, %34 : vector<8x1024xi1>, vector<8x1024xf32>
    %36 = arith.mulf %35, %35 : vector<8x1024xf32>
    %37 = vector.shape_cast %36 : vector<8x1024xf32> to vector<1x8x1024xf32>
    %cst_25 = arith.constant dense<0.000000e+00> : vector<1xf32>
    %38 = vector.multi_reduction <add>, %37, %cst_25 [1, 2] : vector<1x8x1024xf32> to vector<1xf32>
    %39 = vector.shape_cast %38 : vector<1xf32> to vector<1x1x1xf32>
    %40 = vector.extract %39[0, 0, 0] : f32 from vector<1x1x1xf32>
    %41 = vector.broadcast %40 : f32 to vector<1x1x1xf32>
    %c0_26 = arith.constant 0 : index
    %c0_27 = arith.constant 0 : index
    %c0_28 = arith.constant 0 : index
    %42 = vector.load %arg12[%c0_26, %c0_27, %c0_28] : memref<1x1x1xf32, #tpu.memory_space<vmem>>, vector<1x1x1xf32>
    tpu.vector_store %arg12[%c0_26, %c0_27, %c0_28], %41 {strides = array<i32>} : memref<1x1x1xf32, #tpu.memory_space<vmem>>, vector<1x1x1xf32>,
    return
  }
  func.func @transform_0(%arg0: i32) -> (i32, i32) {
    %c0_i32 = arith.constant 0 : i32
    %c0_i32_0 = arith.constant 0 : i32
    return %arg0, %c0_i32 : i32, i32
  }
  func.func @transform_1(%arg0: i32) -> (i32, i32) {
    %c0_i32 = arith.constant 0 : i32
    %c0_i32_0 = arith.constant 0 : i32
    %c0_i32_1 = arith.constant 0 : i32
    return %c0_i32, %c0_i32_0 : i32, i32
  }
  func.func @transform_2(%arg0: i32) -> (i32, i32) {
    %c0_i32 = arith.constant 0 : i32
    %c0_i32_0 = arith.constant 0 : i32
    %c0_i32_1 = arith.constant 0 : i32
    return %c0_i32, %c0_i32_0 : i32, i32
  }
  func.func @transform_3(%arg0: i32) -> (i32, i32) {
    %c0_i32 = arith.constant 0 : i32
    %c0_i32_0 = arith.constant 0 : i32
    %c0_i32_1 = arith.constant 0 : i32
    return %c0_i32, %c0_i32_0 : i32, i32
  }
  func.func @transform_4(%arg0: i32) -> (i32, i32) {
    %c0_i32 = arith.constant 0 : i32
    %c0_i32_0 = arith.constant 0 : i32
    %c0_i32_1 = arith.constant 0 : i32
    return %c0_i32, %c0_i32_0 : i32, i32
  }
  func.func @transform_5(%arg0: i32) -> (i32, i32) {
    %c0_i32 = arith.constant 0 : i32
    %c0_i32_0 = arith.constant 0 : i32
    %c0_i32_1 = arith.constant 0 : i32
    return %c0_i32, %c0_i32_0 : i32, i32
  }
  func.func @transform_6(%arg0: i32) -> (i32, i32) {
    %c0_i32 = arith.constant 0 : i32
    %c0_i32_0 = arith.constant 0 : i32
    %c0_i32_1 = arith.constant 0 : i32
    return %c0_i32, %c0_i32_0 : i32, i32
  }
  func.func @transform_7(%arg0: i32) -> (i32, i32) {
    %c0_i32 = arith.constant 0 : i32
    %c0_i32_0 = arith.constant 0 : i32
    %c0_i32_1 = arith.constant 0 : i32
    return %c0_i32, %c0_i32_0 : i32, i32
  }
  func.func @transform_8(%arg0: i32) -> (i32, i32) {
    %c0_i32 = arith.constant 0 : i32
    %c0_i32_0 = arith.constant 0 : i32
    %c0_i32_1 = arith.constant 0 : i32
    return %c0_i32, %c0_i32_0 : i32, i32
  }
  func.func @transform_9(%arg0: i32) -> (i32, i32) {
    %c0_i32 = arith.constant 0 : i32
    %c0_i32_0 = arith.constant 0 : i32
    return %arg0, %c0_i32 : i32, i32
  }
  func.func @transform_10(%arg0: i32) -> (i32, i32) {
    %c0_i32 = arith.constant 0 : i32
    %c0_i32_0 = arith.constant 0 : i32
    return %arg0, %c0_i32 : i32, i32
  }
  func.func @transform_11(%arg0: i32) -> (i32, i32, i32) {
    %c0_i32 = arith.constant 0 : i32
    %c0_i32_0 = arith.constant 0 : i32
    %c0_i32_1 = arith.constant 0 : i32
    return %arg0, %c0_i32, %c0_i32_0 : i32, i32, i32
  }
}

</mosaic_0001>

<llo_original>
// kernel: tpu_custom_call.1
$region0: #{tpu_custom_call.1}
  #allocation0 [shape = 'u32[]', space=smem, size = 0x4, offset = 0x4, fixed_abs, tag = 'smem constant byte address 0x4 - core index']
  #allocation1 [shape = 'u32[72,128]{1,0:T(1,128)}', space=vmem, size = 0x9000, scoped, tag = 'internal scratch']
  %s0 = inlined_call_operand.hbm [shape: f32[8,1024], index: 0, kind: input, shape index: {}]
  %s1 = inlined_call_operand.hbm [shape: f32[1024,128], index: 1, kind: input, shape index: {}]
  %s2 = inlined_call_operand.vmem [shape: f32[1,128], index: 2, kind: input, shape index: {}]
  %s3 = inlined_call_operand.hbm [shape: f32[128,128], index: 3, kind: input, shape index: {}]
  %s4 = inlined_call_operand.vmem [shape: f32[1,128], index: 4, kind: input, shape index: {}]
  %s5 = inlined_call_operand.hbm [shape: f32[128,128], index: 5, kind: input, shape index: {}]
  %s6 = inlined_call_operand.vmem [shape: f32[1,128], index: 6, kind: input, shape index: {}]
  %s7 = inlined_call_operand.hbm [shape: f32[128,1024], index: 7, kind: input, shape index: {}]
  %s8 = inlined_call_operand.hbm [shape: f32[1,1024], index: 8, kind: input, shape index: {}]
  %s9 = inlined_call_operand.hbm [shape: f32[8,128], index: 9, kind: output, shape index: {0}]
  %s10 = inlined_call_operand.hbm [shape: f32[8,1024], index: 10, kind: output, shape index: {1}]
  %s11 = inlined_call_operand.hbm [shape: f32[1,1,1], index: 11, kind: output, shape index: {2}]
  %12 = xla_tuple %s9, %s10, %s11
  %s13 = sld [smem:[#allocation0]]
  $region86: #{tpu_custom_call.1} parent=0
    _
  %s15 = ssub.s32 1, %s13
  %s16 = scalar_select 0, %s15, %s13
  $region1: #{tpu_custom_call.1} parent=0
    #allocation2 [shape = 'u8[32768]{0}', space=vmem, size = 0x8000, scoped, tag = 'input window, operand 0, single buffered']
    #allocation3 [shape = 's32[1]{0}', space=sflag, size = 0x4, scoped, tag = 'scoped memory for tpu_custom_call.1']
    #allocation4 [shape = 's32[1]{0}', space=sflag, size = 0x4, scoped, tag = 'scoped memory for tpu_custom_call.1']
    #allocation5 [shape = 'u8[524288]{0}', space=vmem, size = 0x80000, scoped, tag = 'input window, operand 1, single buffered']
    #allocation6 [shape = 's32[1]{0}', space=sflag, size = 0x4, scoped, tag = 'scoped memory for tpu_custom_call.1']
    #allocation7 [shape = 'u8[65536]{0}', space=vmem, size = 0x10000, scoped, tag = 'input window, operand 3, single buffered']
    #allocation8 [shape = 'u8[65536]{0}', space=vmem, size = 0x10000, scoped, tag = 'input window, operand 5, single buffered']
    #allocation9 [shape = 's32[1]{0}', space=sflag, size = 0x4, scoped, tag = 'scoped memory for tpu_custom_call.1']
    #allocation10 [shape = 'u8[524288]{0}', space=vmem, size = 0x80000, scoped, tag = 'input window, operand 7, single buffered']
    #allocation11 [shape = 'u8[4096]{0}', space=vmem, size = 0x1000, scoped, tag = 'input window, operand 8, single buffered']
    #allocation12 [shape = 's32[1]{0}', space=sflag, size = 0x4, scoped, tag = 'scoped memory for tpu_custom_call.1']
    #allocation13 [shape = 'u8[4096]{0}', space=vmem, size = 0x1000, scoped, tag = 'output window, operand 0, single buffered']
    #allocation14 [shape = 'u8[32768]{0}', space=vmem, size = 0x8000, scoped, tag = 'output window, operand 1, single buffered']
    #allocation15 [shape = 's32[1]{0}', space=sflag, size = 0x4, scoped, tag = 'scoped memory for tpu_custom_call.1']
    #allocation16 [shape = 'u8[512]{0}', space=vmem, size = 0x400, scoped, tag = 'output window, operand 2, single buffered']
    %17 = vsyncpa [#allocation3], 0
    %18 = vsyncpa [#allocation6], 0
    %19 = vsyncpa [#allocation9], 0
    %20 = vsyncpa [#allocation12], 0
    %21 = vsyncpa [#allocation4], 0
    %22 = vsyncpa [#allocation15], 0
    // Predicated region
    $region2: #{tpu_custom_call.1} parent=1 // pred_check
      _
    $region3: #{tpu_custom_call.1} parent=1 // pred_check_branch
      %24 = sbr.rel (0) target = $region5
    $region4: #{tpu_custom_call.1} parent=1 // pred_region
      %26 = vsyncadd [#allocation3], 0
      %s28 = sshll.u32 %s0, 4
      %s29 = int_to_ptr.hbm [resolvable:$true] %s28
      %s30 = sshll.u32 [#allocation2], 4
      %s31 = int_to_ptr.vmem [resolvable:$true] %s30
      %33 = dma.hbm_to_vmem [thread:$0]  %s29, 1024, %s31, [#allocation3]
    $region5: #{tpu_custom_call.1} parent=1 // pred_fallthru
      _
    // Predicated region
    $region6: #{tpu_custom_call.1} parent=1 // pred_check
      _
    $region7: #{tpu_custom_call.1} parent=1 // pred_check_branch
      %35 = sbr.rel (0) target = $region9
    $region8: #{tpu_custom_call.1} parent=1 // pred_region
      %37 = vsyncadd [#allocation6], 0
      %s38 = sshll.u32 %s1, 4
      %s39 = int_to_ptr.hbm [resolvable:$true] %s38
      %s40 = sshll.u32 [#allocation5], 4
      %s41 = int_to_ptr.vmem [resolvable:$true] %s40
      %46 = dma.hbm_to_vmem [thread:$0]  %s39, 16384, %s41, [#allocation6], 128, 128, 8
    $region9: #{tpu_custom_call.1} parent=1 // pred_fallthru
      _
    // Predicated region
    $region10: #{tpu_custom_call.1} parent=1 // pred_check
      _
    $region11: #{tpu_custom_call.1} parent=1 // pred_check_branch
      %48 = sbr.rel (0) target = $region13
    $region12: #{tpu_custom_call.1} parent=1 // pred_region
      _
    $region13: #{tpu_custom_call.1} parent=1 // pred_fallthru
      _
    // Predicated region
    $region14: #{tpu_custom_call.1} parent=1 // pred_check
      _
    $region15: #{tpu_custom_call.1} parent=1 // pred_check_branch
      %50 = sbr.rel (0) target = $region17
    $region16: #{tpu_custom_call.1} parent=1 // pred_region
      %52 = vsyncadd [#allocation6], 0
      %s53 = sshll.u32 %s3, 4
      %s54 = int_to_ptr.hbm [resolvable:$true] %s53
      %s55 = sshll.u32 [#allocation7], 4
      %s56 = int_to_ptr.vmem [resolvable:$true] %s55
      %61 = dma.hbm_to_vmem [thread:$0]  %s54, 2048, %s56, [#allocation6], 128, 128, 8
    $region17: #{tpu_custom_call.1} parent=1 // pred_fallthru
      _
    // Predicated region
    $region18: #{tpu_custom_call.1} parent=1 // pred_check
      _
    $region19: #{tpu_custom_call.1} parent=1 // pred_check_branch
      %63 = sbr.rel (0) target = $region21
    $region20: #{tpu_custom_call.1} parent=1 // pred_region
      _
    $region21: #{tpu_custom_call.1} parent=1 // pred_fallthru
      _
    // Predicated region
    $region22: #{tpu_custom_call.1} parent=1 // pred_check
      _
    $region23: #{tpu_custom_call.1} parent=1 // pred_check_branch
      %65 = sbr.rel (0) target = $region25
    $region24: #{tpu_custom_call.1} parent=1 // pred_region
      %67 = vsyncadd [#allocation9], 0
      %s68 = sshll.u32 %s5, 4
      %s69 = int_to_ptr.hbm [resolvable:$true] %s68
      %s70 = sshll.u32 [#allocation8], 4
      %s71 = int_to_ptr.vmem [resolvable:$true] %s70
      %76 = dma.hbm_to_vmem [thread:$0]  %s69, 2048, %s71, [#allocation9], 128, 128, 8
    $region25: #{tpu_custom_call.1} parent=1 // pred_fallthru
      _
    // Predicated region
    $region26: #{tpu_custom_call.1} parent=1 // pred_check
      _
    $region27: #{tpu_custom_call.1} parent=1 // pred_check_branch
      %78 = sbr.rel (0) target = $region29
    $region28: #{tpu_custom_call.1} parent=1 // pred_region
      _
    $region29: #{tpu_custom_call.1} parent=1 // pred_fallthru
      _
    // Predicated region
    $region30: #{tpu_custom_call.1} parent=1 // pred_check
      _
    $region31: #{tpu_custom_call.1} parent=1 // pred_check_branch
      %80 = sbr.rel (0) target = $region33
    $region32: #{tpu_custom_call.1} parent=1 // pred_region
      %82 = vsyncadd [#allocation9], 0
      %s83 = sshll.u32 %s7, 4
      %s84 = int_to_ptr.hbm [resolvable:$true] %s83
      %s85 = sshll.u32 [#allocation10], 4
      %s86 = int_to_ptr.vmem [resolvable:$true] %s85
      %91 = dma.hbm_to_vmem [thread:$0]  %s84, 16384, %s86, [#allocation9], 1024, 1024, 64
    $region33: #{tpu_custom_call.1} parent=1 // pred_fallthru
      _
    // Predicated region
    $region34: #{tpu_custom_call.1} parent=1 // pred_check
      _
    $region35: #{tpu_custom_call.1} parent=1 // pred_check_branch
      %93 = sbr.rel (0) target = $region37
    $region36: #{tpu_custom_call.1} parent=1 // pred_region
      %95 = vsyncadd [#allocation12], 0
      %s97 = sshll.u32 %s8, 4
      %s98 = int_to_ptr.hbm [resolvable:$true] %s97
      %s99 = sshll.u32 [#allocation11], 4
      %s100 = int_to_ptr.vmem [resolvable:$true] %s99
      %102 = dma.hbm_to_vmem [thread:$0]  %s98, 128, %s100, [#allocation12]
    $region37: #{tpu_custom_call.1} parent=1 // pred_fallthru
      _
    // Predicated region
    $region38: #{tpu_custom_call.1} parent=1 // pred_check
      _
    $region39: #{tpu_custom_call.1} parent=1 // pred_check_branch
      %104 = sbr.rel (0) target = $region41
    $region40: #{tpu_custom_call.1} parent=1 // pred_region
      %106 = dma.done [#allocation3], 1024
    $region41: #{tpu_custom_call.1} parent=1 // pred_fallthru
      _
    // Predicated region
    $region42: #{tpu_custom_call.1} parent=1 // pred_check
      _
    $region43: #{tpu_custom_call.1} parent=1 // pred_check_branch
      %108 = sbr.rel (0) target = $region45
    $region44: #{tpu_custom_call.1} parent=1 // pred_region
      %110 = dma.done [#allocation6], 16384
    $region45: #{tpu_custom_call.1} parent=1 // pred_fallthru
      _
    // Predicated region
    $region46: #{tpu_custom_call.1} parent=1 // pred_check
      _
    $region47: #{tpu_custom_call.1} parent=1 // pred_check_branch
      %112 = sbr.rel (0) target = $region49
    $region48: #{tpu_custom_call.1} parent=1 // pred_region
      %114 = dma.done [#allocation6], 2048
    $region49: #{tpu_custom_call.1} parent=1 // pred_fallthru
      _
    // Predicated region
    $region50: #{tpu_custom_call.1} parent=1 // pred_check
      _
    $region51: #{tpu_custom_call.1} parent=1 // pred_check_branch
      %116 = sbr.rel (0) target = $region53
    $region52: #{tpu_custom_call.1} parent=1 // pred_region
      %118 = dma.done [#allocation9], 2048
    $region53: #{tpu_custom_call.1} parent=1 // pred_fallthru
      _
    // Predicated region
    $region54: #{tpu_custom_call.1} parent=1 // pred_check
      _
    $region55: #{tpu_custom_call.1} parent=1 // pred_check_branch
      %120 = sbr.rel (0) target = $region57
    $region56: #{tpu_custom_call.1} parent=1 // pred_region
      %122 = dma.done [#allocation9], 16384
    $region57: #{tpu_custom_call.1} parent=1 // pred_fallthru
      _
    // Predicated region
    $region58: #{tpu_custom_call.1} parent=1 // pred_check
      _
    $region59: #{tpu_custom_call.1} parent=1 // pred_check_branch
      %124 = sbr.rel (0) target = $region61
    $region60: #{tpu_custom_call.1} parent=1 // pred_region
      %126 = dma.done [#allocation12], 128
    $region61: #{tpu_custom_call.1} parent=1 // pred_fallthru
      _
    %v127 = vld [vmem:[#allocation2] sm:$0xff]
    %v128 = vld [vmem:[#allocation2 + $0x8] sm:$0xff]
    %v129 = vld [vmem:[#allocation2 + $0x10] sm:$0xff]
    %v130 = vld [vmem:[#allocation2 + $0x18] sm:$0xff]
    %v131 = vld [vmem:[#allocation2 + $0x20] sm:$0xff]
    %v132 = vld [vmem:[#allocation2 + $0x28] sm:$0xff]
    %v133 = vld [vmem:[#allocation2 + $0x30] sm:$0xff]
    %v134 = vld [vmem:[#allocation2 + $0x38] sm:$0xff]
    %v135 = vld [vmem:[%s2] sm:$0x1]
    %v136 = vld [vmem:[%s4] sm:$0x1]
    %v137 = vld [vmem:[%s6] sm:$0x1]
    %v138 = vld [vmem:[#allocation11] sm:$0xff]
    %v139 = vld [vmem:[#allocation5] sm:$0xff]
    %v140 = vld [vmem:[#allocation5 + $0x8] sm:$0xff]
    %v141 = vld [vmem:[#allocation5 + $0x10] sm:$0xff]
    %v142 = vld [vmem:[#allocation5 + $0x18] sm:$0xff]
    %v143 = vld [vmem:[#allocation5 + $0x20] sm:$0xff]
    %v144 = vld [vmem:[#allocation5 + $0x28] sm:$0xff]
    %v145 = vld [vmem:[#allocation5 + $0x30] sm:$0xff]
    %v146 = vld [vmem:[#allocation5 + $0x38] sm:$0xff]
    %v147 = vld [vmem:[#allocation5 + $0x40] sm:$0xff]
    %v148 = vld [vmem:[#allocation5 + $0x48] sm:$0xff]
    %v149 = vld [vmem:[#allocation5 + $0x50] sm:$0xff]
    %v150 = vld [vmem:[#allocation5 + $0x58] sm:$0xff]
    %v151 = vld [vmem:[#allocation5 + $0x60] sm:$0xff]
    %v152 = vld [vmem:[#allocation5 + $0x68] sm:$0xff]
    %v153 = vld [vmem:[#allocation5 + $0x70] sm:$0xff]
    %v154 = vld [vmem:[#allocation5 + $0x78] sm:$0xff]
    %v155 = vld [vmem:[#allocation5 + $0x80] sm:$0xff]
    %v156 = vld [vmem:[#allocation5 + $0x88] sm:$0xff]
    %v157 = vld [vmem:[#allocation5 + $0x90] sm:$0xff]
    %v158 = vld [vmem:[#allocation5 + $0x98] sm:$0xff]
    %v159 = vld [vmem:[#allocation5 + $0xa0] sm:$0xff]
    %v160 = vld [vmem:[#allocation5 + $0xa8] sm:$0xff]
    %v161 = vld [vmem:[#allocation5 + $0xb0] sm:$0xff]
    %v162 = vld [vmem:[#allocation5 + $0xb8] sm:$0xff]
    %v163 = vld [vmem:[#allocation5 + $0xc0] sm:$0xff]
    %v164 = vld [vmem:[#allocation5 + $0xc8] sm:$0xff]
    %v165 = vld [vmem:[#allocation5 + $0xd0] sm:$0xff]
    %v166 = vld [vmem:[#allocation5 + $0xd8] sm:$0xff]
    %v167 = vld [vmem:[#allocation5 + $0xe0] sm:$0xff]
    %v168 = vld [vmem:[#allocation5 + $0xe8] sm:$0xff]
    %v169 = vld [vmem:[#allocation5 + $0xf0] sm:$0xff]
    %v170 = vld [vmem:[#allocation5 + $0xf8] sm:$0xff]
    %v171 = vld [vmem:[#allocation5 + $0x100] sm:$0xff]
    %v172 = vld [vmem:[#allocation5 + $0x108] sm:$0xff]
    %v173 = vld [vmem:[#allocation5 + $0x110] sm:$0xff]
    %v174 = vld [vmem:[#allocation5 + $0x118] sm:$0xff]
    %v175 = vld [vmem:[#allocation5 + $0x120] sm:$0xff]
    %v176 = vld [vmem:[#allocation5 + $0x128] sm:$0xff]
    %v177 = vld [vmem:[#allocation5 + $0x130] sm:$0xff]
    %v178 = vld [vmem:[#allocation5 + $0x138] sm:$0xff]
    %v179 = vld [vmem:[#allocation5 + $0x140] sm:$0xff]
    %v180 = vld [vmem:[#allocation5 + $0x148] sm:$0xff]
    %v181 = vld [vmem:[#allocation5 + $0x150] sm:$0xff]
    %v182 = vld [vmem:[#allocation5 + $0x158] sm:$0xff]
    %v183 = vld [vmem:[#allocation5 + $0x160] sm:$0xff]
    %v184 = vld [vmem:[#allocation5 + $0x168] sm:$0xff]
    %v185 = vld [vmem:[#allocation5 + $0x170] sm:$0xff]
    %v186 = vld [vmem:[#allocation5 + $0x178] sm:$0xff]
    %v187 = vld [vmem:[#allocation5 + $0x180] sm:$0xff]
    %v188 = vld [vmem:[#allocation5 + $0x188] sm:$0xff]
    %v189 = vld [vmem:[#allocation5 + $0x190] sm:$0xff]
    %v190 = vld [vmem:[#allocation5 + $0x198] sm:$0xff]
    %v191 = vld [vmem:[#allocation5 + $0x1a0] sm:$0xff]
    %v192 = vld [vmem:[#allocation5 + $0x1a8] sm:$0xff]
    %v193 = vld [vmem:[#allocation5 + $0x1b0] sm:$0xff]
    %v194 = vld [vmem:[#allocation5 + $0x1b8] sm:$0xff]
    %v195 = vld [vmem:[#allocation5 + $0x1c0] sm:$0xff]
    %v196 = vld [vmem:[#allocation5 + $0x1c8] sm:$0xff]
    %v197 = vld [vmem:[#allocation5 + $0x1d0] sm:$0xff]
    %v198 = vld [vmem:[#allocation5 + $0x1d8] sm:$0xff]
    %v199 = vld [vmem:[#allocation5 + $0x1e0] sm:$0xff]
    %v200 = vld [vmem:[#allocation5 + $0x1e8] sm:$0xff]
    %v201 = vld [vmem:[#allocation5 + $0x1f0] sm:$0xff]
    %v202 = vld [vmem:[#allocation5 + $0x1f8] sm:$0xff]
    %v203 = vld [vmem:[#allocation5 + $0x200] sm:$0xff]
    %v204 = vld [vmem:[#allocation5 + $0x208] sm:$0xff]
    %v205 = vld [vmem:[#allocation5 + $0x210] sm:$0xff]
    %v206 = vld [vmem:[#allocation5 + $0x218] sm:$0xff]
    %v207 = vld [vmem:[#allocation5 + $0x220] sm:$0xff]
    %v208 = vld [vmem:[#allocation5 + $0x228] sm:$0xff]
    %v209 = vld [vmem:[#allocation5 + $0x230] sm:$0xff]
    %v210 = vld [vmem:[#allocation5 + $0x238] sm:$0xff]
    %v211 = vld [vmem:[#allocation5 + $0x240] sm:$0xff]
    %v212 = vld [vmem:[#allocation5 + $0x248] sm:$0xff]
    %v213 = vld [vmem:[#allocation5 + $0x250] sm:$0xff]
    %v214 = vld [vmem:[#allocation5 + $0x258] sm:$0xff]
    %v215 = vld [vmem:[#allocation5 + $0x260] sm:$0xff]
    %v216 = vld [vmem:[#allocation5 + $0x268] sm:$0xff]
    %v217 = vld [vmem:[#allocation5 + $0x270] sm:$0xff]
    %v218 = vld [vmem:[#allocation5 + $0x278] sm:$0xff]
    %v219 = vld [vmem:[#allocation5 + $0x280] sm:$0xff]
    %v220 = vld [vmem:[#allocation5 + $0x288] sm:$0xff]
    %v221 = vld [vmem:[#allocation5 + $0x290] sm:$0xff]
    %v222 = vld [vmem:[#allocation5 + $0x298] sm:$0xff]
    %v223 = vld [vmem:[#allocation5 + $0x2a0] sm:$0xff]
    %v224 = vld [vmem:[#allocation5 + $0x2a8] sm:$0xff]
    %v225 = vld [vmem:[#allocation5 + $0x2b0] sm:$0xff]
    %v226 = vld [vmem:[#allocation5 + $0x2b8] sm:$0xff]
    %v227 = vld [vmem:[#allocation5 + $0x2c0] sm:$0xff]
    %v228 = vld [vmem:[#allocation5 + $0x2c8] sm:$0xff]
    %v229 = vld [vmem:[#allocation5 + $0x2d0] sm:$0xff]
    %v230 = vld [vmem:[#allocation5 + $0x2d8] sm:$0xff]
    %v231 = vld [vmem:[#allocation5 + $0x2e0] sm:$0xff]
    %v232 = vld [vmem:[#allocation5 + $0x2e8] sm:$0xff]
    %v233 = vld [vmem:[#allocation5 + $0x2f0] sm:$0xff]
    %v234 = vld [vmem:[#allocation5 + $0x2f8] sm:$0xff]
    %v235 = vld [vmem:[#allocation5 + $0x300] sm:$0xff]
    %v236 = vld [vmem:[#allocation5 + $0x308] sm:$0xff]
    %v237 = vld [vmem:[#allocation5 + $0x310] sm:$0xff]
    %v238 = vld [vmem:[#allocation5 + $0x318] sm:$0xff]
    %v239 = vld [vmem:[#allocation5 + $0x320] sm:$0xff]
    %v240 = vld [vmem:[#allocation5 + $0x328] sm:$0xff]
    %v241 = vld [vmem:[#allocation5 + $0x330] sm:$0xff]
    %v242 = vld [vmem:[#allocation5 + $0x338] sm:$0xff]
    %v243 = vld [vmem:[#allocation5 + $0x340] sm:$0xff]
    %v244 = vld [vmem:[#allocation5 + $0x348] sm:$0xff]
    %v245 = vld [vmem:[#allocation5 + $0x350] sm:$0xff]
    %v246 = vld [vmem:[#allocation5 + $0x358] sm:$0xff]
    %v247 = vld [vmem:[#allocation5 + $0x360] sm:$0xff]
    %v248 = vld [vmem:[#allocation5 + $0x368] sm:$0xff]
    %v249 = vld [vmem:[#allocation5 + $0x370] sm:$0xff]
    %v250 = vld [vmem:[#allocation5 + $0x378] sm:$0xff]
    %v251 = vld [vmem:[#allocation5 + $0x380] sm:$0xff]
    %v252 = vld [vmem:[#allocation5 + $0x388] sm:$0xff]
    %v253 = vld [vmem:[#allocation5 + $0x390] sm:$0xff]
    %v254 = vld [vmem:[#allocation5 + $0x398] sm:$0xff]
    %v255 = vld [vmem:[#allocation5 + $0x3a0] sm:$0xff]
    %v256 = vld [vmem:[#allocation5 + $0x3a8] sm:$0xff]
    %v257 = vld [vmem:[#allocation5 + $0x3b0] sm:$0xff]
    %v258 = vld [vmem:[#allocation5 + $0x3b8] sm:$0xff]
    %v259 = vld [vmem:[#allocation5 + $0x3c0] sm:$0xff]
    %v260 = vld [vmem:[#allocation5 + $0x3c8] sm:$0xff]
    %v261 = vld [vmem:[#allocation5 + $0x3d0] sm:$0xff]
    %v262 = vld [vmem:[#allocation5 + $0x3d8] sm:$0xff]
    %v263 = vld [vmem:[#allocation5 + $0x3e0] sm:$0xff]
    %v264 = vld [vmem:[#allocation5 + $0x3e8] sm:$0xff]
    %v265 = vld [vmem:[#allocation5 + $0x3f0] sm:$0xff]
    %v266 = vld [vmem:[#allocation5 + $0x3f8] sm:$0xff]
    %v268 = vperm.slane %v135, 0
    %270 = vmatpush.msra.mxu0 %v154
    %271 = vmatpush.msra.mxu0 %v153
    %272 = vmatpush.msra.mxu0 %v152
    %273 = vmatpush.msra.mxu0 %v151
    %274 = vmatpush.msra.mxu0 %v150
    %275 = vmatpush.msra.mxu0 %v149
    %276 = vmatpush.msra.mxu0 %v148
    %277 = vmatpush.msra.mxu0 %v147
    %278 = vmatpush.msra.mxu0 %v146
    %279 = vmatpush.msra.mxu0 %v145
    %280 = vmatpush.msra.mxu0 %v144
    %281 = vmatpush.msra.mxu0 %v143
    %282 = vmatpush.msra.mxu0 %v142
    %283 = vmatpush.msra.mxu0 %v141
    %284 = vmatpush.msra.mxu0 %v140
    %285 = vmatpush.msra.mxu0 %v139
    %286 = vmatmul.f32.gmra.mxu0 %v127
    %v287 = vpop.f32.mrf.mxu0
    %v288 = vadd.f32 %v268, %v287
    %289 = vdwg.mxu0
    %290 = vmatpush.msra.mxu0 %v170
    %291 = vmatpush.msra.mxu0 %v169
    %292 = vmatpush.msra.mxu0 %v168
    %293 = vmatpush.msra.mxu0 %v167
    %294 = vmatpush.msra.mxu0 %v166
    %295 = vmatpush.msra.mxu0 %v165
    %296 = vmatpush.msra.mxu0 %v164
    %297 = vmatpush.msra.mxu0 %v163
    %298 = vmatpush.msra.mxu0 %v162
    %299 = vmatpush.msra.mxu0 %v161
    %300 = vmatpush.msra.mxu0 %v160
    %301 = vmatpush.msra.mxu0 %v159
    %302 = vmatpush.msra.mxu0 %v158
    %303 = vmatpush.msra.mxu0 %v157
    %304 = vmatpush.msra.mxu0 %v156
    %305 = vmatpush.msra.mxu0 %v155
    %306 = vmatmul.f32.gmra.mxu0 %v128
    %v307 = vpop.f32.mrf.mxu0
    %v308 = vadd.f32 %v288, %v307
    %309 = vdwg.mxu0
    %310 = vmatpush.msra.mxu0 %v186
    %311 = vmatpush.msra.mxu0 %v185
    %312 = vmatpush.msra.mxu0 %v184
    %313 = vmatpush.msra.mxu0 %v183
    %314 = vmatpush.msra.mxu0 %v182
    %315 = vmatpush.msra.mxu0 %v181
    %316 = vmatpush.msra.mxu0 %v180
    %317 = vmatpush.msra.mxu0 %v179
    %318 = vmatpush.msra.mxu0 %v178
    %319 = vmatpush.msra.mxu0 %v177
    %320 = vmatpush.msra.mxu0 %v176
    %321 = vmatpush.msra.mxu0 %v175
    %322 = vmatpush.msra.mxu0 %v174
    %323 = vmatpush.msra.mxu0 %v173
    %324 = vmatpush.msra.mxu0 %v172
    %325 = vmatpush.msra.mxu0 %v171
    %326 = vmatmul.f32.gmra.mxu0 %v129
    %v327 = vpop.f32.mrf.mxu0
    %v328 = vadd.f32 %v308, %v327
    %329 = vdwg.mxu0
    %330 = vmatpush.msra.mxu0 %v202
    %331 = vmatpush.msra.mxu0 %v201
    %332 = vmatpush.msra.mxu0 %v200
    %333 = vmatpush.msra.mxu0 %v199
    %334 = vmatpush.msra.mxu0 %v198
    %335 = vmatpush.msra.mxu0 %v197
    %336 = vmatpush.msra.mxu0 %v196
    %337 = vmatpush.msra.mxu0 %v195
    %338 = vmatpush.msra.mxu0 %v194
    %339 = vmatpush.msra.mxu0 %v193
    %340 = vmatpush.msra.mxu0 %v192
    %341 = vmatpush.msra.mxu0 %v191
    %342 = vmatpush.msra.mxu0 %v190
    %343 = vmatpush.msra.mxu0 %v189
    %344 = vmatpush.msra.mxu0 %v188
    %345 = vmatpush.msra.mxu0 %v187
    %346 = vmatmul.f32.gmra.mxu0 %v130
    %v347 = vpop.f32.mrf.mxu0
    %v348 = vadd.f32 %v328, %v347
    %349 = vdwg.mxu0
    %350 = vmatpush.msra.mxu0 %v218
    %351 = vmatpush.msra.mxu0 %v217
    %352 = vmatpush.msra.mxu0 %v216
    %353 = vmatpush.msra.mxu0 %v215
    %354 = vmatpush.msra.mxu0 %v214
    %355 = vmatpush.msra.mxu0 %v213
    %356 = vmatpush.msra.mxu0 %v212
    %357 = vmatpush.msra.mxu0 %v211
    %358 = vmatpush.msra.mxu0 %v210
    %359 = vmatpush.msra.mxu0 %v209
    %360 = vmatpush.msra.mxu0 %v208
    %361 = vmatpush.msra.mxu0 %v207
    %362 = vmatpush.msra.mxu0 %v206
    %363 = vmatpush.msra.mxu0 %v205
    %364 = vmatpush.msra.mxu0 %v204
    %365 = vmatpush.msra.mxu0 %v203
    %366 = vmatmul.f32.gmra.mxu0 %v131
    %v367 = vpop.f32.mrf.mxu0
    %v368 = vadd.f32 %v348, %v367
    %369 = vdwg.mxu0
    %370 = vmatpush.msra.mxu0 %v234
    %371 = vmatpush.msra.mxu0 %v233
    %372 = vmatpush.msra.mxu0 %v232
    %373 = vmatpush.msra.mxu0 %v231
    %374 = vmatpush.msra.mxu0 %v230
    %375 = vmatpush.msra.mxu0 %v229
    %376 = vmatpush.msra.mxu0 %v228
    %377 = vmatpush.msra.mxu0 %v227
    %378 = vmatpush.msra.mxu0 %v226
    %379 = vmatpush.msra.mxu0 %v225
    %380 = vmatpush.msra.mxu0 %v224
    %381 = vmatpush.msra.mxu0 %v223
    %382 = vmatpush.msra.mxu0 %v222
    %383 = vmatpush.msra.mxu0 %v221
    %384 = vmatpush.msra.mxu0 %v220
    %385 = vmatpush.msra.mxu0 %v219
    %386 = vmatmul.f32.gmra.mxu0 %v132
    %v387 = vpop.f32.mrf.mxu0
    %v388 = vadd.f32 %v368, %v387
    %389 = vdwg.mxu0
    %390 = vmatpush.msra.mxu0 %v250
    %391 = vmatpush.msra.mxu0 %v249
    %392 = vmatpush.msra.mxu0 %v248
    %393 = vmatpush.msra.mxu0 %v247
    %394 = vmatpush.msra.mxu0 %v246
    %395 = vmatpush.msra.mxu0 %v245
    %396 = vmatpush.msra.mxu0 %v244
    %397 = vmatpush.msra.mxu0 %v243
    %398 = vmatpush.msra.mxu0 %v242
    %399 = vmatpush.msra.mxu0 %v241
    %400 = vmatpush.msra.mxu0 %v240
    %401 = vmatpush.msra.mxu0 %v239
    %402 = vmatpush.msra.mxu0 %v238
    %403 = vmatpush.msra.mxu0 %v237
    %404 = vmatpush.msra.mxu0 %v236
    %405 = vmatpush.msra.mxu0 %v235
    %406 = vmatmul.f32.gmra.mxu0 %v133
    %v407 = vpop.f32.mrf.mxu0
    %v408 = vadd.f32 %v388, %v407
    %409 = vdwg.mxu0
    %410 = vmatpush.msra.mxu0 %v266
    %411 = vmatpush.msra.mxu0 %v265
    %412 = vmatpush.msra.mxu0 %v264
    %413 = vmatpush.msra.mxu0 %v263
    %414 = vmatpush.msra.mxu0 %v262
    %415 = vmatpush.msra.mxu0 %v261
    %416 = vmatpush.msra.mxu0 %v260
    %417 = vmatpush.msra.mxu0 %v259
    %418 = vmatpush.msra.mxu0 %v258
    %419 = vmatpush.msra.mxu0 %v257
    %420 = vmatpush.msra.mxu0 %v256
    %421 = vmatpush.msra.mxu0 %v255
    %422 = vmatpush.msra.mxu0 %v254
    %423 = vmatpush.msra.mxu0 %v253
    %424 = vmatpush.msra.mxu0 %v252
    %425 = vmatpush.msra.mxu0 %v251
    %426 = vmatmul.f32.gmra.mxu0 %v134
    %v427 = vpop.f32.mrf.mxu0
    %v428 = vadd.f32 %v408, %v427
    %429 = vdwg.mxu0
    %v430 = vtanh.pop %v428
    %v431 = vld [vmem:[#allocation7] sm:$0xff]
    %v432 = vld [vmem:[#allocation7 + $0x8] sm:$0xff]
    %v433 = vld [vmem:[#allocation7 + $0x10] sm:$0xff]
    %v434 = vld [vmem:[#allocation7 + $0x18] sm:$0xff]
    %v435 = vld [vmem:[#allocation7 + $0x20] sm:$0xff]
    %v436 = vld [vmem:[#allocation7 + $0x28] sm:$0xff]
    %v437 = vld [vmem:[#allocation7 + $0x30] sm:$0xff]
    %v438 = vld [vmem:[#allocation7 + $0x38] sm:$0xff]
    %v439 = vld [vmem:[#allocation7 + $0x40] sm:$0xff]
    %v440 = vld [vmem:[#allocation7 + $0x48] sm:$0xff]
    %v441 = vld [vmem:[#allocation7 + $0x50] sm:$0xff]
    %v442 = vld [vmem:[#allocation7 + $0x58] sm:$0xff]
    %v443 = vld [vmem:[#allocation7 + $0x60] sm:$0xff]
    %v444 = vld [vmem:[#allocation7 + $0x68] sm:$0xff]
    %v445 = vld [vmem:[#allocation7 + $0x70] sm:$0xff]
    %v446 = vld [vmem:[#allocation7 + $0x78] sm:$0xff]
    %v448 = vperm.slane %v136, 0
    %450 = vmatpush.msra.mxu0 %v446
    %451 = vmatpush.msra.mxu0 %v445
    %452 = vmatpush.msra.mxu0 %v444
    %453 = vmatpush.msra.mxu0 %v443
    %454 = vmatpush.msra.mxu0 %v442
    %455 = vmatpush.msra.mxu0 %v441
    %456 = vmatpush.msra.mxu0 %v440
    %457 = vmatpush.msra.mxu0 %v439
    %458 = vmatpush.msra.mxu0 %v438
    %459 = vmatpush.msra.mxu0 %v437
    %460 = vmatpush.msra.mxu0 %v436
    %461 = vmatpush.msra.mxu0 %v435
    %462 = vmatpush.msra.mxu0 %v434
    %463 = vmatpush.msra.mxu0 %v433
    %464 = vmatpush.msra.mxu0 %v432
    %465 = vmatpush.msra.mxu0 %v431
    %466 = vmatmul.f32.gmra.mxu0 %v430
    %v467 = vpop.f32.mrf.mxu0
    %v468 = vadd.f32 %v448, %v467
    %469 = vdwg.mxu0
    %v470 = vtanh.pop %v468
    %v471 = vld [vmem:[#allocation8] sm:$0xff]
    %v472 = vld [vmem:[#allocation8 + $0x8] sm:$0xff]
    %v473 = vld [vmem:[#allocation8 + $0x10] sm:$0xff]
    %v474 = vld [vmem:[#allocation8 + $0x18] sm:$0xff]
    %v475 = vld [vmem:[#allocation8 + $0x20] sm:$0xff]
    %v476 = vld [vmem:[#allocation8 + $0x28] sm:$0xff]
    %v477 = vld [vmem:[#allocation8 + $0x30] sm:$0xff]
    %v478 = vld [vmem:[#allocation8 + $0x38] sm:$0xff]
    %v479 = vld [vmem:[#allocation8 + $0x40] sm:$0xff]
    %v480 = vld [vmem:[#allocation8 + $0x48] sm:$0xff]
    %v481 = vld [vmem:[#allocation8 + $0x50] sm:$0xff]
    %v482 = vld [vmem:[#allocation8 + $0x58] sm:$0xff]
    %v483 = vld [vmem:[#allocation8 + $0x60] sm:$0xff]
    %v484 = vld [vmem:[#allocation8 + $0x68] sm:$0xff]
    %v485 = vld [vmem:[#allocation8 + $0x70] sm:$0xff]
    %v486 = vld [vmem:[#allocation8 + $0x78] sm:$0xff]
    %v488 = vperm.slane %v137, 0
    %490 = vmatpush.msra.mxu0 %v486
    %491 = vmatpush.msra.mxu0 %v485
    %492 = vmatpush.msra.mxu0 %v484
    %493 = vmatpush.msra.mxu0 %v483
    %494 = vmatpush.msra.mxu0 %v482
    %495 = vmatpush.msra.mxu0 %v481
    %496 = vmatpush.msra.mxu0 %v480
    %497 = vmatpush.msra.mxu0 %v479
    %498 = vmatpush.msra.mxu0 %v478
    %499 = vmatpush.msra.mxu0 %v477
    %500 = vmatpush.msra.mxu0 %v476
    %501 = vmatpush.msra.mxu0 %v475
    %502 = vmatpush.msra.mxu0 %v474
    %503 = vmatpush.msra.mxu0 %v473
    %504 = vmatpush.msra.mxu0 %v472
    %505 = vmatpush.msra.mxu0 %v471
    %506 = vmatmul.f32.gmra.mxu0 %v470
    %v507 = vpop.f32.mrf.mxu0
    %v508 = vadd.f32 %v488, %v507
    %509 = vdwg.mxu0
    %v510 = vtanh.pop %v508
    %v511 = vld [vmem:[#allocation10] sm:$0xff]
    %v512 = vld [vmem:[#allocation10 + $0x8] sm:$0xff]
    %v513 = vld [vmem:[#allocation10 + $0x10] sm:$0xff]
    %v514 = vld [vmem:[#allocation10 + $0x18] sm:$0xff]
    %v515 = vld [vmem:[#allocation10 + $0x20] sm:$0xff]
    %v516 = vld [vmem:[#allocation10 + $0x28] sm:$0xff]
    %v517 = vld [vmem:[#allocation10 + $0x30] sm:$0xff]
    %v518 = vld [vmem:[#allocation10 + $0x38] sm:$0xff]
    %v519 = vld [vmem:[#allocation10 + $0x40] sm:$0xff]
    %v520 = vld [vmem:[#allocation10 + $0x48] sm:$0xff]
    %v521 = vld [vmem:[#allocation10 + $0x50] sm:$0xff]
    %v522 = vld [vmem:[#allocation10 + $0x58] sm:$0xff]
    %v523 = vld [vmem:[#allocation10 + $0x60] sm:$0xff]
    %v524 = vld [vmem:[#allocation10 + $0x68] sm:$0xff]
    %v525 = vld [vmem:[#allocation10 + $0x70] sm:$0xff]
    %v526 = vld [vmem:[#allocation10 + $0x78] sm:$0xff]
    %v527 = vld [vmem:[#allocation10 + $0x80] sm:$0xff]
    %v528 = vld [vmem:[#allocation10 + $0x88] sm:$0xff]
    %v529 = vld [vmem:[#allocation10 + $0x90] sm:$0xff]
    %v530 = vld [vmem:[#allocation10 + $0x98] sm:$0xff]
    %v531 = vld [vmem:[#allocation10 + $0xa0] sm:$0xff]
    %v532 = vld [vmem:[#allocation10 + $0xa8] sm:$0xff]
    %v533 = vld [vmem:[#allocation10 + $0xb0] sm:$0xff]
    %v534 = vld [vmem:[#allocation10 + $0xb8] sm:$0xff]
    %v535 = vld [vmem:[#allocation10 + $0xc0] sm:$0xff]
    %v536 = vld [vmem:[#allocation10 + $0xc8] sm:$0xff]
    %v537 = vld [vmem:[#allocation10 + $0xd0] sm:$0xff]
    %v538 = vld [vmem:[#allocation10 + $0xd8] sm:$0xff]
    %v539 = vld [vmem:[#allocation10 + $0xe0] sm:$0xff]
    %v540 = vld [vmem:[#allocation10 + $0xe8] sm:$0xff]
    %v541 = vld [vmem:[#allocation10 + $0xf0] sm:$0xff]
    %v542 = vld [vmem:[#allocation10 + $0xf8] sm:$0xff]
    %v543 = vld [vmem:[#allocation10 + $0x100] sm:$0xff]
    %v544 = vld [vmem:[#allocation10 + $0x108] sm:$0xff]
    %v545 = vld [vmem:[#allocation10 + $0x110] sm:$0xff]
    %v546 = vld [vmem:[#allocation10 + $0x118] sm:$0xff]
    %v547 = vld [vmem:[#allocation10 + $0x120] sm:$0xff]
    %v548 = vld [vmem:[#allocation10 + $0x128] sm:$0xff]
    %v549 = vld [vmem:[#allocation10 + $0x130] sm:$0xff]
    %v550 = vld [vmem:[#allocation10 + $0x138] sm:$0xff]
    %v551 = vld [vmem:[#allocation10 + $0x140] sm:$0xff]
    %v552 = vld [vmem:[#allocation10 + $0x148] sm:$0xff]
    %v553 = vld [vmem:[#allocation10 + $0x150] sm:$0xff]
    %v554 = vld [vmem:[#allocation10 + $0x158] sm:$0xff]
    %v555 = vld [vmem:[#allocation10 + $0x160] sm:$0xff]
    %v556 = vld [vmem:[#allocation10 + $0x168] sm:$0xff]
    %v557 = vld [vmem:[#allocation10 + $0x170] sm:$0xff]
    %v558 = vld [vmem:[#allocation10 + $0x178] sm:$0xff]
    %v559 = vld [vmem:[#allocation10 + $0x180] sm:$0xff]
    %v560 = vld [vmem:[#allocation10 + $0x188] sm:$0xff]
    %v561 = vld [vmem:[#allocation10 + $0x190] sm:$0xff]
    %v562 = vld [vmem:[#allocation10 + $0x198] sm:$0xff]
    %v563 = vld [vmem:[#allocation10 + $0x1a0] sm:$0xff]
    %v564 = vld [vmem:[#allocation10 + $0x1a8] sm:$0xff]
    %v565 = vld [vmem:[#allocation10 + $0x1b0] sm:$0xff]
    %v566 = vld [vmem:[#allocation10 + $0x1b8] sm:$0xff]
    %v567 = vld [vmem:[#allocation10 + $0x1c0] sm:$0xff]
    %v568 = vld [vmem:[#allocation10 + $0x1c8] sm:$0xff]
    %v569 = vld [vmem:[#allocation10 + $0x1d0] sm:$0xff]
    %v570 = vld [vmem:[#allocation10 + $0x1d8] sm:$0xff]
    %v571 = vld [vmem:[#allocation10 + $0x1e0] sm:$0xff]
    %v572 = vld [vmem:[#allocation10 + $0x1e8] sm:$0xff]
    %v573 = vld [vmem:[#allocation10 + $0x1f0] sm:$0xff]
    %v574 = vld [vmem:[#allocation10 + $0x1f8] sm:$0xff]
    %v575 = vld [vmem:[#allocation10 + $0x200] sm:$0xff]
    %v576 = vld [vmem:[#allocation10 + $0x208] sm:$0xff]
    %v577 = vld [vmem:[#allocation10 + $0x210] sm:$0xff]
    %v578 = vld [vmem:[#allocation10 + $0x218] sm:$0xff]
    %v579 = vld [vmem:[#allocation10 + $0x220] sm:$0xff]
    %v580 = vld [vmem:[#allocation10 + $0x228] sm:$0xff]
    %v581 = vld [vmem:[#allocation10 + $0x230] sm:$0xff]
    %v582 = vld [vmem:[#allocation10 + $0x238] sm:$0xff]
    %v583 = vld [vmem:[#allocation10 + $0x240] sm:$0xff]
    %v584 = vld [vmem:[#allocation10 + $0x248] sm:$0xff]
    %v585 = vld [vmem:[#allocation10 + $0x250] sm:$0xff]
    %v586 = vld [vmem:[#allocation10 + $0x258] sm:$0xff]
    %v587 = vld [vmem:[#allocation10 + $0x260] sm:$0xff]
    %v588 = vld [vmem:[#allocation10 + $0x268] sm:$0xff]
    %v589 = vld [vmem:[#allocation10 + $0x270] sm:$0xff]
    %v590 = vld [vmem:[#allocation10 + $0x278] sm:$0xff]
    %v591 = vld [vmem:[#allocation10 + $0x280] sm:$0xff]
    %v592 = vld [vmem:[#allocation10 + $0x288] sm:$0xff]
    %v593 = vld [vmem:[#allocation10 + $0x290] sm:$0xff]
    %v594 = vld [vmem:[#allocation10 + $0x298] sm:$0xff]
    %v595 = vld [vmem:[#allocation10 + $0x2a0] sm:$0xff]
    %v596 = vld [vmem:[#allocation10 + $0x2a8] sm:$0xff]
    %v597 = vld [vmem:[#allocation10 + $0x2b0] sm:$0xff]
    %v598 = vld [vmem:[#allocation10 + $0x2b8] sm:$0xff]
    %v599 = vld [vmem:[#allocation10 + $0x2c0] sm:$0xff]
    %v600 = vld [vmem:[#allocation10 + $0x2c8] sm:$0xff]
    %v601 = vld [vmem:[#allocation10 + $0x2d0] sm:$0xff]
    %v602 = vld [vmem:[#allocation10 + $0x2d8] sm:$0xff]
    %v603 = vld [vmem:[#allocation10 + $0x2e0] sm:$0xff]
    %v604 = vld [vmem:[#allocation10 + $0x2e8] sm:$0xff]
    %v605 = vld [vmem:[#allocation10 + $0x2f0] sm:$0xff]
    %v606 = vld [vmem:[#allocation10 + $0x2f8] sm:$0xff]
    %v607 = vld [vmem:[#allocation10 + $0x300] sm:$0xff]
    %v608 = vld [vmem:[#allocation10 + $0x308] sm:$0xff]
    %v609 = vld [vmem:[#allocation10 + $0x310] sm:$0xff]
    %v610 = vld [vmem:[#allocation10 + $0x318] sm:$0xff]
    %v611 = vld [vmem:[#allocation10 + $0x320] sm:$0xff]
    %v612 = vld [vmem:[#allocation10 + $0x328] sm:$0xff]
    %v613 = vld [vmem:[#allocation10 + $0x330] sm:$0xff]
    %v614 = vld [vmem:[#allocation10 + $0x338] sm:$0xff]
    %v615 = vld [vmem:[#allocation10 + $0x340] sm:$0xff]
    %v616 = vld [vmem:[#allocation10 + $0x348] sm:$0xff]
    %v617 = vld [vmem:[#allocation10 + $0x350] sm:$0xff]
    %v618 = vld [vmem:[#allocation10 + $0x358] sm:$0xff]
    %v619 = vld [vmem:[#allocation10 + $0x360] sm:$0xff]
    %v620 = vld [vmem:[#allocation10 + $0x368] sm:$0xff]
    %v621 = vld [vmem:[#allocation10 + $0x370] sm:$0xff]
    %v622 = vld [vmem:[#allocation10 + $0x378] sm:$0xff]
    %v623 = vld [vmem:[#allocation10 + $0x380] sm:$0xff]
    %v624 = vld [vmem:[#allocation10 + $0x388] sm:$0xff]
    %v625 = vld [vmem:[#allocation10 + $0x390] sm:$0xff]
    %v626 = vld [vmem:[#allocation10 + $0x398] sm:$0xff]
    %v627 = vld [vmem:[#allocation10 + $0x3a0] sm:$0xff]
    %v628 = vld [vmem:[#allocation10 + $0x3a8] sm:$0xff]
    %v629 = vld [vmem:[#allocation10 + $0x3b0] sm:$0xff]
    %v630 = vld [vmem:[#allocation10 + $0x3b8] sm:$0xff]
    %v631 = vld [vmem:[#allocation10 + $0x3c0] sm:$0xff]
    %v632 = vld [vmem:[#allocation10 + $0x3c8] sm:$0xff]
    %v633 = vld [vmem:[#allocation10 + $0x3d0] sm:$0xff]
    %v634 = vld [vmem:[#allocation10 + $0x3d8] sm:$0xff]
    %v635 = vld [vmem:[#allocation10 + $0x3e0] sm:$0xff]
    %v636 = vld [vmem:[#allocation10 + $0x3e8] sm:$0xff]
    %v637 = vld [vmem:[#allocation10 + $0x3f0] sm:$0xff]
    %v638 = vld [vmem:[#allocation10 + $0x3f8] sm:$0xff]
    %v640 = vperm.slane %v138, 0
    %v641 = vperm.slane %v138, 1
    %v642 = vperm.slane %v138, 2
    %v643 = vperm.slane %v138, 3
    %v644 = vperm.slane %v138, 4
    %v645 = vperm.slane %v138, 5
    %v646 = vperm.slane %v138, 6
    %v647 = vperm.slane %v138, 7
    %656 = vmatpush.msra.mxu0 %v631
    %657 = vmatpush.msra.mxu0 %v623
    %658 = vmatpush.msra.mxu0 %v615
    %659 = vmatpush.msra.mxu0 %v607
    %660 = vmatpush.msra.mxu0 %v599
    %661 = vmatpush.msra.mxu0 %v591
    %662 = vmatpush.msra.mxu0 %v583
    %663 = vmatpush.msra.mxu0 %v575
    %664 = vmatpush.msra.mxu0 %v567
    %665 = vmatpush.msra.mxu0 %v559
    %666 = vmatpush.msra.mxu0 %v551
    %667 = vmatpush.msra.mxu0 %v543
    %668 = vmatpush.msra.mxu0 %v535
    %669 = vmatpush.msra.mxu0 %v527
    %670 = vmatpush.msra.mxu0 %v519
    %671 = vmatpush.msra.mxu0 %v511
    %672 = vmatmul.f32.gmra.mxu0 %v510
    %v673 = vpop.f32.mrf.mxu0
    %v674 = vadd.f32 %v640, %v673
    %675 = vdwg.mxu0
    %676 = vmatpush.msra.mxu0 %v632
    %677 = vmatpush.msra.mxu0 %v624
    %678 = vmatpush.msra.mxu0 %v616
    %679 = vmatpush.msra.mxu0 %v608
    %680 = vmatpush.msra.mxu0 %v600
    %681 = vmatpush.msra.mxu0 %v592
    %682 = vmatpush.msra.mxu0 %v584
    %683 = vmatpush.msra.mxu0 %v576
    %684 = vmatpush.msra.mxu0 %v568
    %685 = vmatpush.msra.mxu0 %v560
    %686 = vmatpush.msra.mxu0 %v552
    %687 = vmatpush.msra.mxu0 %v544
    %688 = vmatpush.msra.mxu0 %v536
    %689 = vmatpush.msra.mxu0 %v528
    %690 = vmatpush.msra.mxu0 %v520
    %691 = vmatpush.msra.mxu0 %v512
    %692 = vmatmul.f32.gmra.mxu0 %v510
    %v693 = vpop.f32.mrf.mxu0
    %v694 = vadd.f32 %v641, %v693
    %695 = vdwg.mxu0
    %696 = vmatpush.msra.mxu0 %v633
    %697 = vmatpush.msra.mxu0 %v625
    %698 = vmatpush.msra.mxu0 %v617
    %699 = vmatpush.msra.mxu0 %v609
    %700 = vmatpush.msra.mxu0 %v601
    %701 = vmatpush.msra.mxu0 %v593
    %702 = vmatpush.msra.mxu0 %v585
    %703 = vmatpush.msra.mxu0 %v577
    %704 = vmatpush.msra.mxu0 %v569
    %705 = vmatpush.msra.mxu0 %v561
    %706 = vmatpush.msra.mxu0 %v553
    %707 = vmatpush.msra.mxu0 %v545
    %708 = vmatpush.msra.mxu0 %v537
    %709 = vmatpush.msra.mxu0 %v529
    %710 = vmatpush.msra.mxu0 %v521
    %711 = vmatpush.msra.mxu0 %v513
    %712 = vmatmul.f32.gmra.mxu0 %v510
    %v713 = vpop.f32.mrf.mxu0
    %v714 = vadd.f32 %v642, %v713
    %715 = vdwg.mxu0
    %716 = vmatpush.msra.mxu0 %v634
    %717 = vmatpush.msra.mxu0 %v626
    %718 = vmatpush.msra.mxu0 %v618
    %719 = vmatpush.msra.mxu0 %v610
    %720 = vmatpush.msra.mxu0 %v602
    %721 = vmatpush.msra.mxu0 %v594
    %722 = vmatpush.msra.mxu0 %v586
    %723 = vmatpush.msra.mxu0 %v578
    %724 = vmatpush.msra.mxu0 %v570
    %725 = vmatpush.msra.mxu0 %v562
    %726 = vmatpush.msra.mxu0 %v554
    %727 = vmatpush.msra.mxu0 %v546
    %728 = vmatpush.msra.mxu0 %v538
    %729 = vmatpush.msra.mxu0 %v530
    %730 = vmatpush.msra.mxu0 %v522
    %731 = vmatpush.msra.mxu0 %v514
    %732 = vmatmul.f32.gmra.mxu0 %v510
    %v733 = vpop.f32.mrf.mxu0
    %v734 = vadd.f32 %v643, %v733
    %735 = vdwg.mxu0
    %736 = vmatpush.msra.mxu0 %v635
    %737 = vmatpush.msra.mxu0 %v627
    %738 = vmatpush.msra.mxu0 %v619
    %739 = vmatpush.msra.mxu0 %v611
    %740 = vmatpush.msra.mxu0 %v603
    %741 = vmatpush.msra.mxu0 %v595
    %742 = vmatpush.msra.mxu0 %v587
    %743 = vmatpush.msra.mxu0 %v579
    %744 = vmatpush.msra.mxu0 %v571
    %745 = vmatpush.msra.mxu0 %v563
    %746 = vmatpush.msra.mxu0 %v555
    %747 = vmatpush.msra.mxu0 %v547
    %748 = vmatpush.msra.mxu0 %v539
    %749 = vmatpush.msra.mxu0 %v531
    %750 = vmatpush.msra.mxu0 %v523
    %751 = vmatpush.msra.mxu0 %v515
    %752 = vmatmul.f32.gmra.mxu0 %v510
    %v753 = vpop.f32.mrf.mxu0
    %v754 = vadd.f32 %v644, %v753
    %755 = vdwg.mxu0
    %756 = vmatpush.msra.mxu0 %v636
    %757 = vmatpush.msra.mxu0 %v628
    %758 = vmatpush.msra.mxu0 %v620
    %759 = vmatpush.msra.mxu0 %v612
    %760 = vmatpush.msra.mxu0 %v604
    %761 = vmatpush.msra.mxu0 %v596
    %762 = vmatpush.msra.mxu0 %v588
    %763 = vmatpush.msra.mxu0 %v580
    %764 = vmatpush.msra.mxu0 %v572
    %765 = vmatpush.msra.mxu0 %v564
    %766 = vmatpush.msra.mxu0 %v556
    %767 = vmatpush.msra.mxu0 %v548
    %768 = vmatpush.msra.mxu0 %v540
    %769 = vmatpush.msra.mxu0 %v532
    %770 = vmatpush.msra.mxu0 %v524
    %771 = vmatpush.msra.mxu0 %v516
    %772 = vmatmul.f32.gmra.mxu0 %v510
    %v773 = vpop.f32.mrf.mxu0
    %v774 = vadd.f32 %v645, %v773
    %775 = vdwg.mxu0
    %776 = vmatpush.msra.mxu0 %v637
    %777 = vmatpush.msra.mxu0 %v629
    %778 = vmatpush.msra.mxu0 %v621
    %779 = vmatpush.msra.mxu0 %v613
    %780 = vmatpush.msra.mxu0 %v605
    %781 = vmatpush.msra.mxu0 %v597
    %782 = vmatpush.msra.mxu0 %v589
    %783 = vmatpush.msra.mxu0 %v581
    %784 = vmatpush.msra.mxu0 %v573
    %785 = vmatpush.msra.mxu0 %v565
    %786 = vmatpush.msra.mxu0 %v557
    %787 = vmatpush.msra.mxu0 %v549
    %788 = vmatpush.msra.mxu0 %v541
    %789 = vmatpush.msra.mxu0 %v533
    %790 = vmatpush.msra.mxu0 %v525
    %791 = vmatpush.msra.mxu0 %v517
    %792 = vmatmul.f32.gmra.mxu0 %v510
    %v793 = vpop.f32.mrf.mxu0
    %v794 = vadd.f32 %v646, %v793
    %795 = vdwg.mxu0
    %796 = vmatpush.msra.mxu0 %v638
    %797 = vmatpush.msra.mxu0 %v630
    %798 = vmatpush.msra.mxu0 %v622
    %799 = vmatpush.msra.mxu0 %v614
    %800 = vmatpush.msra.mxu0 %v606
    %801 = vmatpush.msra.mxu0 %v598
    %802 = vmatpush.msra.mxu0 %v590
    %803 = vmatpush.msra.mxu0 %v582
    %804 = vmatpush.msra.mxu0 %v574
    %805 = vmatpush.msra.mxu0 %v566
    %806 = vmatpush.msra.mxu0 %v558
    %807 = vmatpush.msra.mxu0 %v550
    %808 = vmatpush.msra.mxu0 %v542
    %809 = vmatpush.msra.mxu0 %v534
    %810 = vmatpush.msra.mxu0 %v526
    %811 = vmatpush.msra.mxu0 %v518
    %812 = vmatmul.f32.gmra.mxu0 %v510
    %v813 = vpop.f32.mrf.mxu0
    %v814 = vadd.f32 %v647, %v813
    %815 = vdwg.mxu0
    %v816 = vtanh.pop %v674
    %v817 = vtanh.pop %v694
    %v818 = vtanh.pop %v714
    %v819 = vtanh.pop %v734
    %v820 = vtanh.pop %v754
    %v821 = vtanh.pop %v774
    %v822 = vtanh.pop %v794
    %v823 = vtanh.pop %v814
    %824 = vst [vmem:[#allocation13] sm:$0xff] %v470
    %825 = vst [vmem:[#allocation14] sm:$0xff] %v816
    %826 = vst [vmem:[#allocation14 + $0x8] sm:$0xff] %v817
    %827 = vst [vmem:[#allocation14 + $0x10] sm:$0xff] %v818
    %828 = vst [vmem:[#allocation14 + $0x18] sm:$0xff] %v819
    %829 = vst [vmem:[#allocation14 + $0x20] sm:$0xff] %v820
    %830 = vst [vmem:[#allocation14 + $0x28] sm:$0xff] %v821
    %831 = vst [vmem:[#allocation14 + $0x30] sm:$0xff] %v822
    %832 = vst [vmem:[#allocation14 + $0x38] sm:$0xff] %v823
    %v833 = vlaneseq
    %v834 = vshrl.u32 %v833, 7
    %s835 = smul.u32 0, 8
    %v836 = vstv %s835
    %v837 = vadd.s32 %v834, %v836
    %vm838 = vcmp.lt.s32.totalorder %v837, 2
    %v839 = vsub.f32 %v127, %v816
    %v840 = vsub.f32 %v128, %v817
    %v841 = vsub.f32 %v129, %v818
    %v842 = vsub.f32 %v130, %v819
    %v843 = vsub.f32 %v131, %v820
    %v844 = vsub.f32 %v132, %v821
    %v845 = vsub.f32 %v133, %v822
    %v846 = vsub.f32 %v134, %v823
    %v847 = vsel %vm838, %v839, 0.0
    %v848 = vsel %vm838, %v840, 0.0
    %v849 = vsel %vm838, %v841, 0.0
    %v850 = vsel %vm838, %v842, 0.0
    %v851 = vsel %vm838, %v843, 0.0
    %v852 = vsel %vm838, %v844, 0.0
    %v853 = vsel %vm838, %v845, 0.0
    %v854 = vsel %vm838, %v846, 0.0
    %v855 = vmul.f32 %v847, %v847
    %v856 = vmul.f32 %v848, %v848
    %v857 = vmul.f32 %v849, %v849
    %v858 = vmul.f32 %v850, %v850
    %v859 = vmul.f32 %v851, %v851
    %v860 = vmul.f32 %v852, %v852
    %v861 = vmul.f32 %v853, %v853
    %v862 = vmul.f32 %v854, %v854
    %v863 = vadd.f32 %v855, %v856
    %v864 = vadd.f32 %v863, %v857
    %v865 = vadd.f32 %v864, %v858
    %v866 = vadd.f32 %v865, %v859
    %v867 = vadd.f32 %v866, %v860
    %v868 = vadd.f32 %v867, %v861
    %v869 = vadd.f32 %v868, %v862
    %870 = vadd.xlane.f32.xlu0 %v869
    %v871 = vpop.xlane.xlu0 %870
    %v872 = vrot.slane %v871, 4
    %v873 = vadd.f32 %v871, %v872
    %v874 = vrot.slane %v873, 2
    %v875 = vadd.f32 %v873, %v874
    %v876 = vrot.slane %v875, 1
    %v877 = vadd.f32 %v875, %v876
    %s878 = vtos %v877
    %v879 = vstv %s878
    %vm880 = vcmask 0
    %881 = vst.msk [vmem:[#allocation16] sm:$0x1] %vm880, %v879
    // Predicated region
    $region62: #{tpu_custom_call.1} parent=1 // pred_check
      _
    $region63: #{tpu_custom_call.1} parent=1 // pred_check_branch
      %883 = sbr.rel (0) target = $region65
    $region64: #{tpu_custom_call.1} parent=1 // pred_region
      %885 = vsyncadd [#allocation4], 0
      %s887 = sshll.u32 [#allocation13], 4
      %s888 = int_to_ptr.vmem [resolvable:$true] %s887
      %s889 = sshll.u32 %s9, 4
      %s890 = int_to_ptr.hbm [resolvable:$true] %s889
      %892 = dma.vmem_to_hbm [thread:$0]  %s888, 128, %s890, [#allocation4]
    $region65: #{tpu_custom_call.1} parent=1 // pred_fallthru
      _
    // Predicated region
    $region66: #{tpu_custom_call.1} parent=1 // pred_check
      _
    $region67: #{tpu_custom_call.1} parent=1 // pred_check_branch
      %894 = sbr.rel (0) target = $region69
    $region68: #{tpu_custom_call.1} parent=1 // pred_region
      %896 = vsyncadd [#allocation15], 0
      %s898 = sshll.u32 [#allocation14], 4
      %s899 = int_to_ptr.vmem [resolvable:$true] %s898
      %s900 = sshll.u32 %s10, 4
      %s901 = int_to_ptr.hbm [resolvable:$true] %s900
      %903 = dma.vmem_to_hbm [thread:$0]  %s899, 1024, %s901, [#allocation15]
    $region69: #{tpu_custom_call.1} parent=1 // pred_fallthru
      _
    // Predicated region
    $region70: #{tpu_custom_call.1} parent=1 // pred_check
      _
    $region71: #{tpu_custom_call.1} parent=1 // pred_check_branch
      %905 = sbr.rel (0) target = $region73
    $region72: #{tpu_custom_call.1} parent=1 // pred_region
      %907 = vsyncadd [#allocation15], 0
      %s909 = sshll.u32 [#allocation16], 4
      %s910 = int_to_ptr.vmem [resolvable:$true] %s909
      %s911 = sshll.u32 %s11, 4
      %s912 = int_to_ptr.hbm [resolvable:$true] %s911
      %914 = dma.vmem_to_hbm [thread:$0]  %s910, 16, %s912, [#allocation15]
    $region73: #{tpu_custom_call.1} parent=1 // pred_fallthru
      _
    // Predicated region
    $region74: #{tpu_custom_call.1} parent=1 // pred_check
      _
    $region75: #{tpu_custom_call.1} parent=1 // pred_check_branch
      %916 = sbr.rel (0) target = $region77
    $region76: #{tpu_custom_call.1} parent=1 // pred_region
      %918 = dma.done [#allocation4], 128
    $region77: #{tpu_custom_call.1} parent=1 // pred_fallthru
      _
    // Predicated region
    $region78: #{tpu_custom_call.1} parent=1 // pred_check
      _
    $region79: #{tpu_custom_call.1} parent=1 // pred_check_branch
      %920 = sbr.rel (0) target = $region81
    $region80: #{tpu_custom_call.1} parent=1 // pred_region
      %922 = dma.done [#allocation15], 1024
    $region81: #{tpu_custom_call.1} parent=1 // pred_fallthru
      _
    // Predicated region
    $region82: #{tpu_custom_call.1} parent=1 // pred_check
      _
    $region83: #{tpu_custom_call.1} parent=1 // pred_check_branch
      %924 = sbr.rel (0) target = $region85
    $region84: #{tpu_custom_call.1} parent=1 // pred_region
      %926 = dma.done [#allocation15], 16
    $region85: #{tpu_custom_call.1} parent=1 // pred_fallthru
      _
    %927 = vsyncpa [#allocation3], 1
    %928 = vsyncpa [#allocation6], 1
    %929 = vsyncpa [#allocation9], 1
    %930 = vsyncpa [#allocation12], 1
    %931 = vsyncpa [#allocation4], 1
    %932 = vsyncpa [#allocation15], 1

</llo_original>
